<compile_context>
chip_gen: v6e
topology: v6e:2x2x1
jax: 0.10.0
libtpu: 0.0.40
codegen_flags: <defaults>
</compile_context>

<pallas_src>
import functools

import jax
import jax.numpy as jnp
from jax.experimental import pallas as pl
from jax.experimental.pallas import tpu as pltpu


def _embed_kernel(ids_ref,       # SMEM (N,) int32   (scalar prefetch)
                  tok_hbm,       # HBM  (V, D)       (raw ref, manual DMA)
                  pos_ref,       # VMEM (T, D)       (auto-pipelined tile)
                  out_ref,       # VMEM (T, D)       (auto-pipelined tile)
                  gather_buf,    # VMEM scratch (2, T, D)
                  sems,          # DMA semaphores (2, T)
                  *, rows_per_block: int, dropout_rate: float,
                  apply_dropout: bool, seed: int):
    i = pl.program_id(0)
    n_blocks = pl.num_programs(0)
    T = rows_per_block

    def start_gather(block_idx, slot):
        base = block_idx * T

        @pl.loop(0, T)
        def _(r):
            row = ids_ref[base + r]                       # dynamic SMEM read
            pltpu.make_async_copy(
                tok_hbm.at[pl.ds(row, 1)],                # (1, D) HBM row
                gather_buf.at[slot, pl.ds(r, 1)],         # (1, D) VMEM row
                sems.at[slot, r],
            ).start()

    # Prime the pipeline on the first grid step.
    @pl.when(i == 0)
    def _():
        start_gather(0, 0)

    # Prefetch the next block's rows while this block's DMAs drain / compute.
    @pl.when(i + 1 < n_blocks)
    def _():
        start_gather(i + 1, (i + 1) % 2)

    slot = i % 2

    # Wait for this block's gathered rows.
    @pl.loop(0, T)
    def _(r):
        pltpu.make_async_copy(
            tok_hbm.at[pl.ds(0, 1)],
            gather_buf.at[slot, pl.ds(r, 1)],
            sems.at[slot, r],
        ).wait()

    # Fused token + position embedding add on the tile (VPU).
    emb = gather_buf[slot].astype(jnp.float32) + pos_ref[...]

    if apply_dropout and dropout_rate > 0.0:
        # TODO(synk): training-mode dropout uses the TPU hardware PRNG; the
        # random stream will not bit-match torch.nn.Dropout.
        pltpu.prng_seed(seed, i)                          # per-block seeding
        bits = pltpu.bitcast(
            pltpu.prng_random_bits((T, emb.shape[-1])), jnp.uint32)
        u = (bits >> jnp.uint32(8)).astype(jnp.float32) * (1.0 / (1 << 24))
        keep = (u >= dropout_rate).astype(jnp.float32)
        emb = emb * keep * (1.0 / (1.0 - dropout_rate))
    # eval mode: identity (default)

    out_ref[...] = emb.astype(out_ref.dtype)


def _pick_rows_per_block(L: int) -> int:
    # Largest row-tile that divides L (so pos rows tile cleanly) and is a
    # multiple of 8 (sublane).  Capped so the per-slot scratch & semaphore
    # arrays stay small.
    for cand in (256, 128, 64, 32, 16, 8):
        if L % cand == 0:
            return cand
    raise ValueError("seq_len must be a multiple of 8 for TPU tiling")


def distilbert_embedding(seq, tok_table, pos_table, *,
                         dropout_rate: float = 0.1,
                         training: bool = False,
                         seed: int = 0):
    """seq: (B, L) int32; tok_table: (V, D); pos_table: (L, D)."""
    B, L = seq.shape
    V, D = tok_table.shape
    # The PyTorch forward adds a (max_len, D) tensor to (B, L, D); broadcasting
    # requires max_len == L.
    assert pos_table.shape == (L, D), "max_len must equal seq length"

    N = B * L
    T = _pick_rows_per_block(L)
    n_blocks = N // T

    ids = seq.reshape(N).astype(jnp.int32)

    kernel = functools.partial(
        _embed_kernel, rows_per_block=T, dropout_rate=dropout_rate,
        apply_dropout=training, seed=seed)

    grid_spec = pltpu.PrefetchScalarGridSpec(
        num_scalar_prefetch=1,                 # ids -> SMEM
        grid=(n_blocks,),
        in_specs=[
            pl.BlockSpec(memory_space=pl.ANY),                   # tok_table in HBM
            pl.BlockSpec((T, D), lambda i, _ids: (i % (L // T), 0)),  # pos rows
        ],
        out_specs=pl.BlockSpec((T, D), lambda i, _ids: (i, 0)),
        scratch_shapes=[
            pltpu.VMEM((2, T, D), tok_table.dtype),   # double-buffered gather
            pltpu.SemaphoreType.DMA((2, T)),
        ],
    )

    tok_isz = jnp.dtype(tok_table.dtype).itemsize
    pos_isz = jnp.dtype(pos_table.dtype).itemsize
    bytes_accessed = (N * D * tok_isz      # gathered token rows
                      + L * D * pos_isz    # position table
                      + N * D * 4          # f32 output
                      + N * 4)             # token ids

    out2d = pl.pallas_call(
        kernel,
        out_shape=jax.ShapeDtypeStruct((N, D), jnp.float32),
        grid_spec=grid_spec,
        compiler_params=pltpu.CompilerParams(
            # "arbitrary": cross-iteration DMA prime/prefetch carries scratch +
            # semaphore state, which is not safe to shard across cores.
            dimension_semantics=("arbitrary",)),
        cost_estimate=pl.CostEstimate(
            flops=0, transcendentals=0, bytes_accessed=bytes_accessed),
    )(ids, tok_table, pos_table)

    return out2d.reshape(B, L, D)


if __name__ == "__main__":
    # Small shapes consistent with the module: batch=2, seq=max_len=8,
    # vocab_size=64, embed_dim=128 (lane-dense last dim).
    B, L, V, D = 2, 8, 64, 128

    key = jax.random.PRNGKey(0)
    k_tok, k_pos, k_seq = jax.random.split(key, 3)

    # nn.Embedding default init: N(0, 1)
    tok_table = jax.random.normal(k_tok, (V, D), dtype=jnp.float32)
    pos_table = jax.random.normal(k_pos, (L, D), dtype=jnp.float32)
    seq = jax.random.randint(k_seq, (B, L), 0, V, dtype=jnp.int32)

    out = distilbert_embedding(seq, tok_table, pos_table, training=False)
    out = jax.block_until_ready(out)

    # Pure-JAX reference (eval-mode dropout == identity).
    ref = tok_table[seq] + pos_table[None, :, :]
    assert out.shape == (B, L, D)
    assert jnp.allclose(out, ref, atol=1e-5, rtol=1e-5), "mismatch vs reference"

    print("KERNEL_OK")
</pallas_src>

<mosaic_0001>
module attributes {stable_mosaic.version = 11 : i64} {
  func.func @_embed_kernel(%arg0: i32, %arg1: memref<16xi32, #tpu.memory_space<smem>>, %arg2: memref<64x128xf32, #tpu.memory_space<any>>, %arg3: memref<8x128xf32, #tpu.memory_space<vmem>>, %arg4: memref<8x128xf32, #tpu.memory_space<vmem>>, %arg5: memref<2x8x128xf32, #tpu.memory_space<vmem>>, %arg6: memref<2x8x!tpu.dma_semaphore, #tpu.memory_space<semaphore_mem>>) attributes {dimension_semantics = [#tpu.dimension_semantics<arbitrary>], iteration_bounds = array<i64: 2>, scalar_prefetch = 1 : i64, scratch_operands = 2 : i64, tpu.core_type = #tpu.core_type<tc>, window_params = [{}, {transform_indices = @transform_1, window_bounds = array<i64: 8, 128>}, {transform_indices = @transform_2, window_bounds = array<i64: 8, 128>}]} {
    %c0_i32 = arith.constant 0 : i32
    %0 = arith.cmpi eq, %arg0, %c0_i32 : i32
    %1 = arith.extui %0 : i1 to i32
    %c0_i32_0 = arith.constant 0 : i32
    %2 = arith.cmpi ne, %1, %c0_i32_0 : i32
    scf.if %2 {
      %c0_i32_16 = arith.constant 0 : i32
      %c8_i32_17 = arith.constant 8 : i32
      %24 = arith.addi %c0_i32_16, %c8_i32_17 : i32
      %c1_i32_18 = arith.constant 1 : i32
      scf.for %arg7 = %c0_i32_16 to %24 step %c1_i32_18  : i32 {
        %c1_i32_20 = arith.constant 1 : i32
        %25 = arith.muli %arg7, %c1_i32_20 : i32
        %c0_i32_21 = arith.constant 0 : i32
        %26 = arith.addi %c0_i32_21, %25 : i32
        %c0_i32_22 = arith.constant 0 : i32
        %27 = arith.addi %c0_i32_22, %26 : i32
        %28 = arith.index_cast %27 : i32 to index
        %29 = memref.load %arg1[%28] : memref<16xi32, #tpu.memory_space<smem>>
        %c0_i32_23 = arith.constant 0 : i32
        %c0_i32_24 = arith.constant 0 : i32
        %c0_i32_25 = arith.constant 0 : i32
        %30 = tpu.memref_slice %arg2[%29, %c0_i32_25] : memref<64x128xf32, #tpu.memory_space<any>> -> memref<1x128xf32, #tpu.memory_space<any>>
        %c0_i32_26 = arith.constant 0 : i32
        %31 = tpu.memref_slice %arg5[%c0_i32_23, %26, %c0_i32_26] : memref<2x8x128xf32, #tpu.memory_space<vmem>> -> memref<1x1x128xf32, #tpu.memory_space<vmem>>
        %32 = tpu.memref_squeeze %31 : memref<1x1x128xf32, #tpu.memory_space<vmem>> -> memref<1x128xf32, #tpu.memory_space<vmem>>
        %33 = tpu.memref_slice %arg6[%c0_i32_24, %26] : memref<2x8x!tpu.dma_semaphore, #tpu.memory_space<semaphore_mem>> -> memref<1x1x!tpu.dma_semaphore, #tpu.memory_space<semaphore_mem>>
        %34 = tpu.memref_squeeze %33 : memref<1x1x!tpu.dma_semaphore, #tpu.memory_space<semaphore_mem>> -> memref<!tpu.dma_semaphore, #tpu.memory_space<semaphore_mem>>
        tpu.enqueue_dma source(%30 : memref<1x128xf32, #tpu.memory_space<any>>) target(%32 : memref<1x128xf32, #tpu.memory_space<vmem>>) target_semaphore(%34 : memref<!tpu.dma_semaphore, #tpu.memory_space<semaphore_mem>>)
      }
      %c8_i32_19 = arith.constant 8 : i32
    } else {
    }
    %c1_i32 = arith.constant 1 : i32
    %3 = arith.addi %arg0, %c1_i32 : i32
    %c2_i32 = arith.constant 2 : i32
    %4 = arith.cmpi slt, %3, %c2_i32 : i32
    %5 = arith.extui %4 : i1 to i32
    %c0_i32_1 = arith.constant 0 : i32
    %6 = arith.cmpi ne, %5, %c0_i32_1 : i32
    scf.if %6 {
      %c1_i32_16 = arith.constant 1 : i32
      %24 = arith.addi %arg0, %c1_i32_16 : i32
      %c1_i32_17 = arith.constant 1 : i32
      %25 = arith.addi %arg0, %c1_i32_17 : i32
      %c2_i32_18 = arith.constant 2 : i32
      %c0_i32_19 = arith.constant 0 : i32
      %26 = arith.cmpi eq, %c2_i32_18, %c0_i32_19 : i32
      %c1_i32_20 = arith.constant 1 : i32
      %27 = arith.select %26, %c1_i32_20, %c2_i32_18 : i32
      %28 = arith.remsi %25, %27 : i32
      %c0_i32_21 = arith.constant 0 : i32
      %29 = arith.cmpi ne, %28, %c0_i32_21 : i32
      %c0_i32_22 = arith.constant 0 : i32
      %30 = arith.cmpi slt, %28, %c0_i32_22 : i32
      %c0_i32_23 = arith.constant 0 : i32
      %31 = arith.cmpi slt, %27, %c0_i32_23 : i32
      %32 = arith.xori %30, %31 : i1
      %33 = arith.andi %32, %29 : i1
      %34 = arith.addi %28, %27 : i32
      %35 = arith.select %33, %34, %28 : i32
      %c8_i32_24 = arith.constant 8 : i32
      %36 = arith.muli %24, %c8_i32_24 : i32
      %c0_i32_25 = arith.constant 0 : i32
      %c8_i32_26 = arith.constant 8 : i32
      %37 = arith.addi %c0_i32_25, %c8_i32_26 : i32
      %c1_i32_27 = arith.constant 1 : i32
      scf.for %arg7 = %c0_i32_25 to %37 step %c1_i32_27  : i32 {
        %c1_i32_29 = arith.constant 1 : i32
        %38 = arith.muli %arg7, %c1_i32_29 : i32
        %c0_i32_30 = arith.constant 0 : i32
        %39 = arith.addi %c0_i32_30, %38 : i32
        %40 = arith.addi %36, %39 : i32
        %41 = arith.index_cast %40 : i32 to index
        %42 = memref.load %arg1[%41] : memref<16xi32, #tpu.memory_space<smem>>
        %c0_i32_31 = arith.constant 0 : i32
        %43 = tpu.memref_slice %arg2[%42, %c0_i32_31] : memref<64x128xf32, #tpu.memory_space<any>> -> memref<1x128xf32, #tpu.memory_space<any>>
        %c0_i32_32 = arith.constant 0 : i32
        %44 = tpu.memref_slice %arg5[%35, %39, %c0_i32_32] : memref<2x8x128xf32, #tpu.memory_space<vmem>> -> memref<1x1x128xf32, #tpu.memory_space<vmem>>
        %45 = tpu.memref_squeeze %44 : memref<1x1x128xf32, #tpu.memory_space<vmem>> -> memref<1x128xf32, #tpu.memory_space<vmem>>
        %46 = tpu.memref_slice %arg6[%35, %39] : memref<2x8x!tpu.dma_semaphore, #tpu.memory_space<semaphore_mem>> -> memref<1x1x!tpu.dma_semaphore, #tpu.memory_space<semaphore_mem>>
        %47 = tpu.memref_squeeze %46 : memref<1x1x!tpu.dma_semaphore, #tpu.memory_space<semaphore_mem>> -> memref<!tpu.dma_semaphore, #tpu.memory_space<semaphore_mem>>
        tpu.enqueue_dma source(%43 : memref<1x128xf32, #tpu.memory_space<any>>) target(%45 : memref<1x128xf32, #tpu.memory_space<vmem>>) target_semaphore(%47 : memref<!tpu.dma_semaphore, #tpu.memory_space<semaphore_mem>>)
      }
      %c8_i32_28 = arith.constant 8 : i32
    } else {
    }
    %c2_i32_2 = arith.constant 2 : i32
    %c0_i32_3 = arith.constant 0 : i32
    %7 = arith.cmpi eq, %c2_i32_2, %c0_i32_3 : i32
    %c1_i32_4 = arith.constant 1 : i32
    %8 = arith.select %7, %c1_i32_4, %c2_i32_2 : i32
    %9 = arith.remsi %arg0, %8 : i32
    %c0_i32_5 = arith.constant 0 : i32
    %10 = arith.cmpi ne, %9, %c0_i32_5 : i32
    %c0_i32_6 = arith.constant 0 : i32
    %11 = arith.cmpi slt, %9, %c0_i32_6 : i32
    %c0_i32_7 = arith.constant 0 : i32
    %12 = arith.cmpi slt, %8, %c0_i32_7 : i32
    %13 = arith.xori %11, %12 : i1
    %14 = arith.andi %13, %10 : i1
    %15 = arith.addi %9, %8 : i32
    %16 = arith.select %14, %15, %9 : i32
    %c0_i32_8 = arith.constant 0 : i32
    %c8_i32 = arith.constant 8 : i32
    %17 = arith.addi %c0_i32_8, %c8_i32 : i32
    %c1_i32_9 = arith.constant 1 : i32
    scf.for %arg7 = %c0_i32_8 to %17 step %c1_i32_9  : i32 {
      %c1_i32_16 = arith.constant 1 : i32
      %24 = arith.muli %arg7, %c1_i32_16 : i32
      %c0_i32_17 = arith.constant 0 : i32
      %25 = arith.addi %c0_i32_17, %24 : i32
      %c0_i32_18 = arith.constant 0 : i32
      %c0_i32_19 = arith.constant 0 : i32
      %26 = tpu.memref_slice %arg2[%c0_i32_18, %c0_i32_19] : memref<64x128xf32, #tpu.memory_space<any>> -> memref<1x128xf32, #tpu.memory_space<any>>
      %c0_i32_20 = arith.constant 0 : i32
      %27 = tpu.memref_slice %arg5[%16, %25, %c0_i32_20] : memref<2x8x128xf32, #tpu.memory_space<vmem>> -> memref<1x1x128xf32, #tpu.memory_space<vmem>>
      %28 = tpu.memref_squeeze %27 : memref<1x1x128xf32, #tpu.memory_space<vmem>> -> memref<1x128xf32, #tpu.memory_space<vmem>>
      %29 = tpu.memref_slice %arg6[%16, %25] : memref<2x8x!tpu.dma_semaphore, #tpu.memory_space<semaphore_mem>> -> memref<1x1x!tpu.dma_semaphore, #tpu.memory_space<semaphore_mem>>
      %30 = tpu.memref_squeeze %29 : memref<1x1x!tpu.dma_semaphore, #tpu.memory_space<semaphore_mem>> -> memref<!tpu.dma_semaphore, #tpu.memory_space<semaphore_mem>>
      tpu.wait_dma2 semaphore(%30 : memref<!tpu.dma_semaphore, #tpu.memory_space<semaphore_mem>>) src(%26 : memref<1x128xf32, #tpu.memory_space<any>>) dst(%28 : memref<1x128xf32, #tpu.memory_space<vmem>>)
    }
    %c8_i32_10 = arith.constant 8 : i32
    %18 = arith.index_cast %16 : i32 to index
    %c0 = arith.constant 0 : index
    %c0_11 = arith.constant 0 : index
    %19 = vector.load %arg5[%18, %c0, %c0_11] : memref<2x8x128xf32, #tpu.memory_space<vmem>>, vector<1x8x128xf32>
    %20 = vector.shape_cast %19 : vector<1x8x128xf32> to vector<8x128xf32>
    %c0_12 = arith.constant 0 : index
    %c0_13 = arith.constant 0 : index
    %21 = vector.load %arg3[%c0_12, %c0_13] : memref<8x128xf32, #tpu.memory_space<vmem>>, vector<8x128xf32>
    %22 = arith.addf %20, %21 : vector<8x128xf32>
    %c0_14 = arith.constant 0 : index
    %c0_15 = arith.constant 0 : index
    %23 = vector.load %arg4[%c0_14, %c0_15] : memref<8x128xf32, #tpu.memory_space<vmem>>, vector<8x128xf32>
    tpu.vector_store %arg4[%c0_14, %c0_15], %22 {strides = array<i32>} : memref<8x128xf32, #tpu.memory_space<vmem>>, vector<8x128xf32>,
    return
  }
  func.func @transform_1(%arg0: i32, %arg1: memref<16xi32, #tpu.memory_space<smem>>) -> (i32, i32) {
    %c1_i32 = arith.constant 1 : i32
    %c0_i32 = arith.constant 0 : i32
    %0 = arith.cmpi eq, %c1_i32, %c0_i32 : i32
    %c1_i32_0 = arith.constant 1 : i32
    %1 = arith.select %0, %c1_i32_0, %c1_i32 : i32
    %2 = arith.remsi %arg0, %1 : i32
    %c0_i32_1 = arith.constant 0 : i32
    %3 = arith.cmpi ne, %2, %c0_i32_1 : i32
    %c0_i32_2 = arith.constant 0 : i32
    %4 = arith.cmpi slt, %2, %c0_i32_2 : i32
    %c0_i32_3 = arith.constant 0 : i32
    %5 = arith.cmpi slt, %1, %c0_i32_3 : i32
    %6 = arith.xori %4, %5 : i1
    %7 = arith.andi %6, %3 : i1
    %8 = arith.addi %2, %1 : i32
    %9 = arith.select %7, %8, %2 : i32
    %c0_i32_4 = arith.constant 0 : i32
    %c0_i32_5 = arith.constant 0 : i32
    return %9, %c0_i32_4 : i32, i32
  }
  func.func @transform_2(%arg0: i32, %arg1: memref<16xi32, #tpu.memory_space<smem>>) -> (i32, i32) {
    %c0_i32 = arith.constant 0 : i32
    %c0_i32_0 = arith.constant 0 : i32
    return %arg0, %c0_i32 : i32, i32
  }
}

</mosaic_0001>

<llo_original>
// kernel: tpu_custom_call.1
$region0: #{tpu_custom_call.1}
  #allocation0 [shape = 'u32[]', space=smem, size = 0x4, offset = 0x4, fixed_abs, tag = 'smem constant byte address 0x4 - core index']
  #allocation1 [shape = 'u32[144,128]{1,0:T(1,128)}', space=vmem, size = 0x12000, scoped, tag = 'internal scratch']
  #allocation2 [shape = 'f32[2,8,128]{2,1,0:T(8,128)}', space=vmem, size = 0x2000, scoped, tag = 'scratch operand']
  #allocation3 [shape = 's32[16]{0}', space=sflag, size = 0x40, scoped, tag = 'scratch operand']
  #allocation4 [shape = 's32[1]{0}', space=sflag, size = 0x4, scoped, tag = 'scoped memory for tpu_custom_call.1']
  #allocation5 [shape = 'u8[512]{0}', space=smem, size = 0x200, scoped, tag = 'prefetched SMEM operand 0']
  #allocation10 [shape = 's32[]', space=sflag, size = 0x4, offset = 0, fixed_abs, tag = 'sflag constant byte address 0x0 - dummy sync flag']
  #allocation11 [shape = 's32[]', space=sflag, size = 0x4, offset = 0, fixed_abs, tag = 'sflag constant byte address 0x0 - dummy sync flag']
  #allocation12 [shape = 'u32[]', space=smem, size = 0x4, offset = 0x44, fixed_abs, tag = 'smem constant byte address 0x44 - assertion arg 0']
  #allocation13 [shape = 'u32[]', space=smem, size = 0x4, offset = 0x48, fixed_abs, tag = 'smem constant byte address 0x48 - assertion arg 1']
  #allocation14 [shape = 's32[]', space=sflag, size = 0x4, offset = 0, fixed_abs, tag = 'sflag constant byte address 0x0 - dummy sync flag']
  #allocation15 [shape = 's32[]', space=sflag, size = 0x4, offset = 0, fixed_abs, tag = 'sflag constant byte address 0x0 - dummy sync flag']
  %s0 = inlined_call_operand.hbm [shape: s32[16], index: 0, kind: input, shape index: {}]
  %s1 = inlined_call_operand.hbm [shape: f32[64,128], index: 1, kind: input, shape index: {}]
  %s2 = inlined_call_operand.hbm [shape: f32[8,128], index: 2, kind: input, shape index: {}]
  %s3 = inlined_call_operand.hbm [shape: f32[16,128], index: 3, kind: output, shape index: {}]
  %s4 = sld [smem:[#allocation0]]
  $region78: #{tpu_custom_call.1} parent=0
    _
  %s6 = ssub.s32 1, %s4
  %s7 = scalar_select 0, %s6, %s4
  %9 = dma.hbm_to_smem %s0, 16, [#allocation5], [#allocation4]
  %10 = dma.done [#allocation4], 16
  %11 = sfence
  $region1: #{tpu_custom_call.1} parent=0
    #allocation6 [shape = 'u8[4096]{0}', space=vmem, size = 0x1000, scoped, tag = 'input window, operand 2, single buffered']
    #allocation7 [shape = 's32[2]{0}', space=sflag, size = 0x8, scoped, tag = 'scoped memory for tpu_custom_call.1']
    #allocation8 [shape = 's32[2]{0}', space=sflag, size = 0x8, scoped, tag = 'scoped memory for tpu_custom_call.1']
    #allocation9 [shape = 'u8[8192]{0}', space=vmem, size = 0x2000, scoped, tag = 'output window, operand 0']
    %12 = vsyncpa [#allocation7], 0
    %13 = vsyncpa [#allocation8], 0
    %s14 = scalar_lea.sflag [#allocation8], 1
    %15 = vsyncpa %s14, 0
    loop: start=0, step=1, limit=4
    $region2: #{tpu_custom_call.1} parent=1 // loop_pre_header
      _
    $region3: #{tpu_custom_call.1} parent=1 // loop_header
      %s17 = sphi 0, %s21
      %p18 = scmp.ge.s32.totalorder %s17, 4
      %s25 = sphi 0, %s25
      %s27 = sphi 0, %s25
      %s28 = sphi 0, %s27
      %s42 = sphi 0, %s28
      %s48 = sphi 0, %s50
      %s51 = sphi 0, %s48
      %s52 = sphi 0, %s51
      %s68 = sphi 0, %s52
    $region4: #{tpu_custom_call.1} parent=1 // loop_header_branch
      %20 = sbr.rel (%p18) target = $region8
    $region5: #{tpu_custom_call.1} parent=1 // loop_body
      %s22 = ssub.s32 %s17, 1
      %s23 = ssub.s32 %s17, 2
      %s24 = sadd.s32 %s17, 1
      %s26 = sadd.s32 %s25, 1
      %p29 = scmp.eq.s32.totalorder %s17, 1
      %p30 = scmp.ne.s32.totalorder %s25, %s27
      %p31 = scmp.eq.s32.totalorder %s17, 0
      %p32 = por %p30, %p31
      %p33 = scmp.ne.s32.totalorder %s25, %s27
      %p34 = scmp.eq.s32.totalorder %s22, 1
      %p35 = por %p33, %p34
      %p36 = scmp.ne.s32.totalorder %s27, %s28
      %p37 = scmp.eq.s32.totalorder %s22, 0
      %p38 = por %p36, %p37
      %p39 = scmp.ne.s32.totalorder %s27, %s28
      %p40 = scmp.eq.s32.totalorder %s23, 1
      %p41 = por %p39, %p40
      %p43 = scmp.ne.s32.totalorder %s28, %s42
      %p44 = scmp.eq.s32.totalorder %s23, 0
      %p45 = por %p43, %p44
      %s46 = ssub.s32 %s17, %s24
      %p47 = scmp.eq.s32.totalorder %s46, 0
      %s49 = sadd.s32 %s48, 1
      %s50 = scalar_select %p47, %s48, %s49
      %p53 = pneg %p47
      %p54 = scmp.eq.s32.totalorder %s17, 1
      %p55 = por %p53, %p54
      %p56 = scmp.ne.s32.totalorder %s48, %s51
      %p57 = scmp.eq.s32.totalorder %s17, 0
      %p58 = por %p56, %p57
      %p59 = scmp.ne.s32.totalorder %s48, %s51
      %p60 = scmp.eq.s32.totalorder %s22, 1
      %p61 = por %p59, %p60
      %p62 = scmp.ne.s32.totalorder %s51, %s52
      %p63 = scmp.eq.s32.totalorder %s22, 0
      %p64 = por %p62, %p63
      %p65 = scmp.ne.s32.totalorder %s51, %s52
      %p66 = scmp.eq.s32.totalorder %s23, 1
      %p67 = por %p65, %p66
      %p69 = scmp.ne.s32.totalorder %s52, %s68
      %p70 = scmp.eq.s32.totalorder %s23, 0
      %p71 = por %p69, %p70
      %p72 = scmp.le.s32.totalorder 1, %s17
      %p73 = scmp.lt.s32.totalorder %s17, 3
      %p74 = pnand %p72, %p73
      %p75 = pneg %p74
      // Predicated region
      $region9: #{tpu_custom_call.1} parent=5 // pred_check
        _
      $region10: #{tpu_custom_call.1} parent=5 // pred_check_branch
        %77 = sbr.rel (%p74) target = $region12
      $region11: #{tpu_custom_call.1} parent=5 // pred_region
        %s78 = ssub.s32 %s17, 1
        // Predicated region
        $region13: #{tpu_custom_call.1} parent=11 // pred_check
          %p79 = pneg %p38
        $region14: #{tpu_custom_call.1} parent=11 // pred_check_branch
          %81 = sbr.rel (%p79) target = $region16
        $region15: #{tpu_custom_call.1} parent=11 // pred_region
          %s83 = ssub.s32 128, 128
          %84 = vsyncadd [#allocation7], %s83
          %s86 = sshll.u32 [#allocation6], 4
          %s87 = int_to_ptr.vmem [resolvable:$true] %s86
          %89 = dma.hbm_to_vmem [thread:$0]  %s2, 128, %s87, [#allocation7]
        $region16: #{tpu_custom_call.1} parent=11 // pred_fallthru
          _
      $region12: #{tpu_custom_call.1} parent=5 // pred_fallthru
        _
      %p90 = scmp.lt.s32.totalorder %s17, 2
      // Predicated region
      $region17: #{tpu_custom_call.1} parent=5 // pred_check
        %p91 = pneg %p90
      $region18: #{tpu_custom_call.1} parent=5 // pred_check_branch
        %93 = sbr.rel (%p91) target = $region20
      $region19: #{tpu_custom_call.1} parent=5 // pred_region
        _
      $region20: #{tpu_custom_call.1} parent=5 // pred_fallthru
        _
      %p94 = scmp.le.s32.totalorder 1, %s17
      %p95 = scmp.lt.s32.totalorder %s17, 3
      %p96 = pnand %p94, %p95
      %p97 = pneg %p96
      // Predicated region
      $region21: #{tpu_custom_call.1} parent=5 // pred_check
        _
      $region22: #{tpu_custom_call.1} parent=5 // pred_check_branch
        %99 = sbr.rel (%p96) target = $region24
      $region23: #{tpu_custom_call.1} parent=5 // pred_region
        %s100 = ssub.s32 %s17, 1
        // Predicated region
        $region25: #{tpu_custom_call.1} parent=23 // pred_check
          %p101 = pneg %p38
        $region26: #{tpu_custom_call.1} parent=23 // pred_check_branch
          %103 = sbr.rel (%p101) target = $region28
        $region27: #{tpu_custom_call.1} parent=23 // pred_region
          %104 = dma.done [#allocation7], 128
        $region28: #{tpu_custom_call.1} parent=23 // pred_fallthru
          _
        %p105 = pneg %p38
        %p106 = pneg %p35
        %p107 = pneg %p64
        %p108 = pneg %p61
        %s109 = sand.u32 %s51, 1
        %s110 = scalar_lea.sflag [#allocation8], %s109
        %s111 = sand.u32 %s51, 1
        %s112 = smul.addr %s111, 8
        %s113 = scalar_lea.vmem [#allocation9], %s112
        %p114 = scmp.eq.s32.totalorder %s22, 0
        // Predicated region
        $region29: #{tpu_custom_call.1} parent=23 // pred_check
          %p115 = pneg %p114
        $region30: #{tpu_custom_call.1} parent=23 // pred_check_branch
          %117 = sbr.rel (%p115) target = $region32
        $region31: #{tpu_custom_call.1} parent=23 // pred_region
          loop: start=0, step=1, limit=8
          $region33: #{tpu_custom_call.1} parent=31 // loop_pre_header
            _
          $region34: #{tpu_custom_call.1} parent=31 // loop_header
            %s119 = sphi 0, %s123
            %p120 = scmp.ge.s32.totalorder %s119, 8
          $region35: #{tpu_custom_call.1} parent=31 // loop_header_branch
            %122 = sbr.rel (%p120) target = $region39
          $region36: #{tpu_custom_call.1} parent=31 // loop_body
            %s124 = sld [smem:[#allocation5 + %s119]]
            %s125 = smul.addr %s124, 16
            %s126 = scalar_lea.hbm %s1, %s125
            %s127 = scalar_lea.vmem [#allocation2], %s119
            %s128 = scalar_lea.sflag [#allocation3], %s119
            // Predicated region
            $region40: #{tpu_custom_call.1} parent=36 // pred_check
              _
            $region41: #{tpu_custom_call.1} parent=36 // pred_check_branch
              %130 = sbr.rel target = $region43
            $region42: #{tpu_custom_call.1} parent=36 // pred_region
              %131 = sst [smem:[#allocation12]] [#allocation11]
              %132 = sst [smem:[#allocation13]] [#allocation10]
            $region43: #{tpu_custom_call.1} parent=36 // pred_fallthru
              _
            %134 = shalt.err (0)
            %s136 = sshll.u32 %s127, 4
            %s137 = int_to_ptr.vmem [resolvable:$true] %s136
            %139 = dma.hbm_to_vmem [thread:$0]  %s126, 16, %s137, %s128
          $region37: #{tpu_custom_call.1} parent=31 // loop_footer
            %s123 = sadd.s32 1, %s119
          $region38: #{tpu_custom_call.1} parent=31 // loop_footer_branch
            %118 = sbr.rel target = $region34
          $region39: #{tpu_custom_call.1} parent=31 // loop_exit
            _
        $region32: #{tpu_custom_call.1} parent=23 // pred_fallthru
          _
        %s140 = sadd.s32 %s22, 1
        %p141 = scmp.lt.s32.totalorder %s140, 2
        // Predicated region
        $region44: #{tpu_custom_call.1} parent=23 // pred_check
          %p142 = pneg %p141
        $region45: #{tpu_custom_call.1} parent=23 // pred_check_branch
          %144 = sbr.rel (%p142) target = $region47
        $region46: #{tpu_custom_call.1} parent=23 // pred_region
          %p145 = scmp.lt.s32.totalorder %s140, 0
          %s146 = ssub.s32 0, %s140
          %s147 = scalar_select %p145, %s146, %s140
          %s148 = sand.u32 %s147, 1
          %s149 = ssub.s32 0, %s148
          %s150 = scalar_select %p145, %s149, %s148
          %p151 = scmp.ne.s32.totalorder %s150, 0
          %p152 = scmp.lt.s32.totalorder %s150, 0
          %p153 = pnand %p152, %p151
          %p154 = pneg %p153
          %s155 = sadd.s32 %s150, 2
          %s156 = scalar_select %p154, %s155, %s150
          %s157 = smul.u32 %s140, 8
          loop: start=0, step=1, limit=8
          $region48: #{tpu_custom_call.1} parent=46 // loop_pre_header
            _
          $region49: #{tpu_custom_call.1} parent=46 // loop_header
            %s159 = sphi 0, %s163
            %p160 = scmp.ge.s32.totalorder %s159, 8
          $region50: #{tpu_custom_call.1} parent=46 // loop_header_branch
            %162 = sbr.rel (%p160) target = $region54
          $region51: #{tpu_custom_call.1} parent=46 // loop_body
            %s164 = sadd.s32 %s157, %s159
            %s165 = sld [smem:[#allocation5 + %s164]]
            %s166 = smul.addr %s165, 16
            %s167 = scalar_lea.hbm %s1, %s166
            %s168 = smul.u32 %s156, 8
            %s169 = sadd.s32 %s159, %s168
            %s170 = scalar_lea.vmem [#allocation2], %s169
            %s171 = scalar_lea.sflag [#allocation3], %s169
            // Predicated region
            $region55: #{tpu_custom_call.1} parent=51 // pred_check
              _
            $region56: #{tpu_custom_call.1} parent=51 // pred_check_branch
              %173 = sbr.rel target = $region58
            $region57: #{tpu_custom_call.1} parent=51 // pred_region
              %174 = sst [smem:[#allocation12]] [#allocation15]
              %175 = sst [smem:[#allocation13]] [#allocation14]
            $region58: #{tpu_custom_call.1} parent=51 // pred_fallthru
              _
            %177 = shalt.err (0)
            %s179 = sshll.u32 %s170, 4
            %s180 = int_to_ptr.vmem [resolvable:$true] %s179
            %182 = dma.hbm_to_vmem [thread:$0]  %s167, 16, %s180, %s171
          $region52: #{tpu_custom_call.1} parent=46 // loop_footer
            %s163 = sadd.s32 1, %s159
          $region53: #{tpu_custom_call.1} parent=46 // loop_footer_branch
            %158 = sbr.rel target = $region49
          $region54: #{tpu_custom_call.1} parent=46 // loop_exit
            _
        $region47: #{tpu_custom_call.1} parent=23 // pred_fallthru
          _
        %p183 = scmp.lt.s32.totalorder %s22, 0
        %s184 = ssub.s32 0, %s22
        %s185 = scalar_select %p183, %s184, %s22
        %s186 = sand.u32 %s185, 1
        %s187 = ssub.s32 0, %s186
        %s188 = scalar_select %p183, %s187, %s186
        %p189 = scmp.ne.s32.totalorder %s188, 0
        %p190 = scmp.lt.s32.totalorder %s188, 0
        %p191 = pnand %p190, %p189
        %p192 = pneg %p191
        %s193 = sadd.s32 %s188, 2
        %s194 = scalar_select %p192, %s193, %s188
        loop: start=0, step=1, limit=8
        $region59: #{tpu_custom_call.1} parent=23 // loop_pre_header
          _
        $region60: #{tpu_custom_call.1} parent=23 // loop_header
          %s196 = sphi 0, %s200
          %p197 = scmp.ge.s32.totalorder %s196, 8
        $region61: #{tpu_custom_call.1} parent=23 // loop_header_branch
          %199 = sbr.rel (%p197) target = $region65
        $region62: #{tpu_custom_call.1} parent=23 // loop_body
          %s201 = smul.u32 %s194, 8
          %s202 = sadd.s32 %s196, %s201
          %s203 = scalar_lea.sflag [#allocation3], %s202
          %s204 = smul.u32 1, 1
          %s205 = sshll.u32 %s204, 4
          %206 = dma.done %s203, %s205
        $region63: #{tpu_custom_call.1} parent=23 // loop_footer
          %s200 = sadd.s32 1, %s196
        $region64: #{tpu_custom_call.1} parent=23 // loop_footer_branch
          %195 = sbr.rel target = $region60
        $region65: #{tpu_custom_call.1} parent=23 // loop_exit
          _
        %s207 = smul.u32 %s194, 8
        %s208 = scalar_lea.vmem [#allocation2], %s207
        %v209 = vld [vmem:[%s208] sm:$0xff]
        %v210 = vld [vmem:[#allocation6] sm:$0xff]
        %v211 = vadd.f32 %v209, %v210
        %212 = vst [vmem:[%s113] sm:$0xff] %v211
        %s213 = sand.u32 %s51, 1
        %s214 = scalar_lea.sflag [#allocation8], %s213
        %s215 = sand.u32 %s51, 1
        %s216 = smul.addr %s215, 8
        %s217 = scalar_lea.vmem [#allocation9], %s216
        // Predicated region
        $region66: #{tpu_custom_call.1} parent=23 // pred_check
          %p218 = pneg %p61
        $region67: #{tpu_custom_call.1} parent=23 // pred_check_branch
          %220 = sbr.rel (%p218) target = $region69
        $region68: #{tpu_custom_call.1} parent=23 // pred_region
          %s222 = ssub.s32 128, 128
          %223 = vsyncadd %s214, %s222
          %s224 = smul.addr %s22, 128
          %s225 = scalar_lea.hbm %s3, %s224
          %s227 = sshll.u32 %s217, 4
          %s228 = int_to_ptr.vmem [resolvable:$true] %s227
          %230 = dma.vmem_to_hbm [thread:$0]  %s228, 128, %s225, %s214
        $region69: #{tpu_custom_call.1} parent=23 // pred_fallthru
          _
      $region24: #{tpu_custom_call.1} parent=5 // pred_fallthru
        _
      %p231 = scmp.le.s32.totalorder 2, %s17
      // Predicated region
      $region70: #{tpu_custom_call.1} parent=5 // pred_check
        %p232 = pneg %p231
      $region71: #{tpu_custom_call.1} parent=5 // pred_check_branch
        %234 = sbr.rel (%p232) target = $region73
      $region72: #{tpu_custom_call.1} parent=5 // pred_region
        %s235 = ssub.s32 %s17, 2
        // Predicated region
        $region74: #{tpu_custom_call.1} parent=72 // pred_check
          %p236 = pneg %p67
        $region75: #{tpu_custom_call.1} parent=72 // pred_check_branch
          %238 = sbr.rel (%p236) target = $region77
        $region76: #{tpu_custom_call.1} parent=72 // pred_region
          %s239 = sand.u32 %s52, 1
          %s240 = scalar_lea.sflag [#allocation8], %s239
          %s241 = sand.u32 %s52, 1
          %s242 = smul.addr %s241, 8
          %s243 = scalar_lea.vmem [#allocation9], %s242
          %244 = dma.done %s240, 128
        $region77: #{tpu_custom_call.1} parent=72 // pred_fallthru
          _
      $region73: #{tpu_custom_call.1} parent=5 // pred_fallthru
        _
    $region6: #{tpu_custom_call.1} parent=1 // loop_footer
      %s21 = sadd.s32 1, %s17
    $region7: #{tpu_custom_call.1} parent=1 // loop_footer_branch
      %16 = sbr.rel target = $region3
    $region8: #{tpu_custom_call.1} parent=1 // loop_exit
      _
    %245 = vsyncpa [#allocation7], 1
    %s246 = scalar_lea.sflag [#allocation7], 1
    %247 = vsyncpa %s246, 1
    %248 = vsyncpa [#allocation8], 1
    %s249 = scalar_lea.sflag [#allocation8], 1
    %250 = vsyncpa %s249, 1
  %251 = vsyncmov [#allocation3]
  %s252 = vpop.sfrf %251
  %p253 = scmp.eq.s32.totalorder %s252, 0
  %p254 = pneg %p253
  %256 = shalt.err (%p254)
  %s257 = scalar_lea.sflag [#allocation3], 1
  %258 = vsyncmov %s257
  %s259 = vpop.sfrf %258
  %p260 = scmp.eq.s32.totalorder %s259, 0
  %p261 = pneg %p260
  %263 = shalt.err (%p261)
  %s264 = scalar_lea.sflag [#allocation3], 2
  %265 = vsyncmov %s264
  %s266 = vpop.sfrf %265
  %p267 = scmp.eq.s32.totalorder %s266, 0
  %p268 = pneg %p267
  %270 = shalt.err (%p268)
  %s271 = scalar_lea.sflag [#allocation3], 3
  %272 = vsyncmov %s271
  %s273 = vpop.sfrf %272
  %p274 = scmp.eq.s32.totalorder %s273, 0
  %p275 = pneg %p274
  %277 = shalt.err (%p275)
  %s278 = scalar_lea.sflag [#allocation3], 4
  %279 = vsyncmov %s278
  %s280 = vpop.sfrf %279
  %p281 = scmp.eq.s32.totalorder %s280, 0
  %p282 = pneg %p281
  %284 = shalt.err (%p282)
  %s285 = scalar_lea.sflag [#allocation3], 5
  %286 = vsyncmov %s285
  %s287 = vpop.sfrf %286
  %p288 = scmp.eq.s32.totalorder %s287, 0
  %p289 = pneg %p288
  %291 = shalt.err (%p289)
  %s292 = scalar_lea.sflag [#allocation3], 6
  %293 = vsyncmov %s292
  %s294 = vpop.sfrf %293
  %p295 = scmp.eq.s32.totalorder %s294, 0
  %p296 = pneg %p295
  %298 = shalt.err (%p296)
  %s299 = scalar_lea.sflag [#allocation3], 7
  %300 = vsyncmov %s299
  %s301 = vpop.sfrf %300
  %p302 = scmp.eq.s32.totalorder %s301, 0
  %p303 = pneg %p302
  %305 = shalt.err (%p303)
  %s306 = scalar_lea.sflag [#allocation3], 8
  %307 = vsyncmov %s306
  %s308 = vpop.sfrf %307
  %p309 = scmp.eq.s32.totalorder %s308, 0
  %p310 = pneg %p309
  %312 = shalt.err (%p310)
  %s313 = scalar_lea.sflag [#allocation3], 9
  %314 = vsyncmov %s313
  %s315 = vpop.sfrf %314
  %p316 = scmp.eq.s32.totalorder %s315, 0
  %p317 = pneg %p316
  %319 = shalt.err (%p317)
  %s320 = scalar_lea.sflag [#allocation3], 10
  %321 = vsyncmov %s320
  %s322 = vpop.sfrf %321
  %p323 = scmp.eq.s32.totalorder %s322, 0
  %p324 = pneg %p323
  %326 = shalt.err (%p324)
  %s327 = scalar_lea.sflag [#allocation3], 11
  %328 = vsyncmov %s327
  %s329 = vpop.sfrf %328
  %p330 = scmp.eq.s32.totalorder %s329, 0
  %p331 = pneg %p330
  %333 = shalt.err (%p331)
  %s334 = scalar_lea.sflag [#allocation3], 12
  %335 = vsyncmov %s334
  %s336 = vpop.sfrf %335
  %p337 = scmp.eq.s32.totalorder %s336, 0
  %p338 = pneg %p337
  %340 = shalt.err (%p338)
  %s341 = scalar_lea.sflag [#allocation3], 13
  %342 = vsyncmov %s341
  %s343 = vpop.sfrf %342
  %p344 = scmp.eq.s32.totalorder %s343, 0
  %p345 = pneg %p344
  %347 = shalt.err (%p345)
  %s348 = scalar_lea.sflag [#allocation3], 14
  %349 = vsyncmov %s348
  %s350 = vpop.sfrf %349
  %p351 = scmp.eq.s32.totalorder %s350, 0
  %p352 = pneg %p351
  %354 = shalt.err (%p352)
  %s355 = scalar_lea.sflag [#allocation3], 15
  %356 = vsyncmov %s355
  %s357 = vpop.sfrf %356
  %p358 = scmp.eq.s32.totalorder %s357, 0
  %p359 = pneg %p358
  %361 = shalt.err (%p359)

</llo_original>
